<compile_context>
chip_gen: v7x
topology: tpu7x:2x2x1
jax: 0.10.0
libtpu: 0.0.40
codegen_flags: <defaults>
</compile_context>

<pallas_src>
import jax
import jax.numpy as jnp
from jax.experimental import pallas as pl
from jax.experimental.pallas import tpu as pltpu


def dense_classifier_kernel(x_ref, w1_ref, b1_ref, w2_ref, b2_ref, o_ref):
    """Fused MLP tile: logits = relu(x @ W1 + b1) @ W2 + b2."""
    h = jnp.dot(x_ref[...], w1_ref[...],
                preferred_element_type=jnp.float32)               # [TB, H]  (MXU)
    h = jnp.maximum(h + b1_ref[...].astype(jnp.float32), 0.0)     # bias + ReLU (VPU, f32)
    # Dropout(p=0.2) in eval mode == identity.
    logits = jnp.dot(h.astype(w2_ref.dtype), w2_ref[...],
                     preferred_element_type=jnp.float32)          # [TB, C]  (MXU)
    o_ref[...] = (logits + b2_ref[...].astype(jnp.float32)).astype(o_ref.dtype)


def _round_up(x, m):
    return ((x + m - 1) // m) * m


def dense_classification_forward(embeddings, w1, b1, w2, b2,
                                 *, tile_b=8192, out_dtype=None):
    """embeddings: [B, D]; w1: [D, H]; b1: [1, H]; w2: [H, C]; b2: [1, C].

    Returns logits [B, C] in `out_dtype` (default: embeddings.dtype).
    Pass out_dtype=jnp.bfloat16 to halve the dominant output-writeback bytes.
    """
    B, D = embeddings.shape
    H = w1.shape[1]
    C = w2.shape[1]
    if out_dtype is None:
        out_dtype = embeddings.dtype

    # --- batch tiling --------------------------------------------------------
    # Large tiles amortize the ~0.35us per-grid-step overhead; cap at ~B/2 so
    # the 'parallel' batch axis always has >=2 steps (keeps both v7x TCs busy).
    tb = min(tile_b, max(8, _round_up(pl.cdiv(B, 2), 8)))
    tb = _round_up(tb, 8)                       # sublane alignment
    grid = (pl.cdiv(B, tb),)                    # ragged last tile handled by Pallas

    # --- VMEM budget: double-buffered x/out tiles + resident weights ---------
    in_b = embeddings.dtype.itemsize
    out_b = jnp.dtype(out_dtype).itemsize
    weight_bytes = (w1.size * w1.dtype.itemsize + b1.size * b1.dtype.itemsize
                    + w2.size * w2.dtype.itemsize + b2.size * b2.dtype.itemsize)
    stream_bytes = 2 * tb * (D * in_b + C * out_b)
    vmem_limit = int(min(32 << 20, max(16 << 20, 2 * (stream_bytes + weight_bytes))))

    cost = pl.CostEstimate(
        flops=2 * B * (D * H + H * C),
        transcendentals=0,
        bytes_accessed=B * D * in_b + weight_bytes + B * C * out_b,
    )

    out = pl.pallas_call(
        dense_classifier_kernel,
        out_shape=jax.ShapeDtypeStruct((B, C), out_dtype),
        grid_spec=pltpu.PrefetchScalarGridSpec(
            num_scalar_prefetch=0,
            grid=grid,
            in_specs=[
                # streamed per-tile (double-buffered by BlockSpec pipelining)
                pl.BlockSpec((tb, D), lambda i: (i, 0)),      # x   [TB, D]
                # resident across all grid steps (constant block index)
                pl.BlockSpec((D, H), lambda i: (0, 0)),       # W1  [D, H]
                pl.BlockSpec((1, H), lambda i: (0, 0)),       # b1  [1, H]
                pl.BlockSpec((H, C), lambda i: (0, 0)),       # W2  [H, C]
                pl.BlockSpec((1, C), lambda i: (0, 0)),       # b2  [1, C]
            ],
            out_specs=pl.BlockSpec((tb, C), lambda i: (i, 0)),
        ),
        compiler_params=pltpu.CompilerParams(
            # batch axis is embarrassingly parallel -> shard across v7x's 2 TCs
            dimension_semantics=("parallel",),
            vmem_limit_bytes=vmem_limit,
        ),
        cost_estimate=cost,
    )(embeddings, w1, b1, w2, b2)

    return out


def glorot_uniform(key, fan_in, fan_out, dtype=jnp.float32):
    """Xavier/Glorot uniform init, as in torch_geometric's glorot()."""
    limit = jnp.sqrt(6.0 / (fan_in + fan_out)).astype(dtype)
    return jax.random.uniform(key, (fan_in, fan_out), dtype,
                              minval=-limit, maxval=limit)


if __name__ == "__main__":
    # hparams (small, consistent with the module)
    embedding_dim = 32
    nb_cls_dense_size = 64
    n_classes = 128

    key = jax.random.PRNGKey(0)
    k_x, k_w1, k_b1, k_w2, k_b2, k_x2 = jax.random.split(key, 6)

    # PyTorch nn.Linear.weight is [out, in]; we store the transposed [in, out]
    # layout directly so the kernel does x @ W.
    w1 = glorot_uniform(k_w1, embedding_dim, nb_cls_dense_size)         # [D, H]
    b1 = jax.random.uniform(k_b1, (1, nb_cls_dense_size), jnp.float32,
                            minval=-1.0, maxval=1.0) / jnp.sqrt(embedding_dim)
    w2 = glorot_uniform(k_w2, nb_cls_dense_size, n_classes)             # [H, C]
    b2 = jax.random.uniform(k_b2, (1, n_classes), jnp.float32,
                            minval=-1.0, maxval=1.0) / jnp.sqrt(nb_cls_dense_size)

    # --- small case (single grid step, default tile_b) ---
    batch = 8
    embeddings = jax.random.normal(k_x, (batch, embedding_dim), jnp.float32)
    logits = dense_classification_forward(embeddings, w1, b1, w2, b2)
    logits = jax.block_until_ready(logits)
    ref = jnp.maximum(embeddings @ w1 + b1, 0.0) @ w2 + b2
    assert logits.shape == (batch, n_classes)
    assert logits.dtype == jnp.float32
    assert jnp.allclose(logits, ref, atol=1e-5, rtol=1e-5)

    # --- multi-tile case with a ragged last tile (100 = 3*32 + 4) ---
    batch2 = 100
    embeddings2 = jax.random.normal(k_x2, (batch2, embedding_dim), jnp.float32)
    logits2 = dense_classification_forward(embeddings2, w1, b1, w2, b2,
                                           tile_b=32)
    logits2 = jax.block_until_ready(logits2)
    ref2 = jnp.maximum(embeddings2 @ w1 + b1, 0.0) @ w2 + b2
    assert logits2.shape == (batch2, n_classes)
    assert jnp.allclose(logits2, ref2, atol=1e-4, rtol=1e-4)

    # --- bf16 logits path (halves output writeback bytes) ---
    logits3 = dense_classification_forward(embeddings2, w1, b1, w2, b2,
                                           tile_b=32, out_dtype=jnp.bfloat16)
    logits3 = jax.block_until_ready(logits3)
    assert logits3.dtype == jnp.bfloat16
    assert jnp.allclose(logits3.astype(jnp.float32), ref2, atol=5e-2, rtol=2e-2)

    print("KERNEL_OK")
</pallas_src>

<mosaic_0001>
module attributes {stable_mosaic.version = 11 : i64} {
  func.func @dense_classifier_kernel(%arg0: i32, %arg1: memref<8x32xf32, #tpu.memory_space<vmem>>, %arg2: memref<32x64xf32, #tpu.memory_space<vmem>>, %arg3: memref<1x64xf32, #tpu.memory_space<vmem>>, %arg4: memref<64x128xf32, #tpu.memory_space<vmem>>, %arg5: memref<1x128xf32, #tpu.memory_space<vmem>>, %arg6: memref<8x128xf32, #tpu.memory_space<vmem>>) attributes {dimension_semantics = [#tpu.dimension_semantics<parallel>], iteration_bounds = array<i64: 1>, scalar_prefetch = 0 : i64, scratch_operands = 0 : i64, tpu.core_type = #tpu.core_type<tc>, window_params = [{transform_indices = @transform_0, window_bounds = array<i64: 8, 32>}, {pipeline_mode = #tpu.pipeline_mode<synchronous>, transform_indices = @transform_1, window_bounds = array<i64: 32, 64>}, {pipeline_mode = #tpu.pipeline_mode<synchronous>, transform_indices = @transform_2, window_bounds = array<i64: 1, 64>}, {pipeline_mode = #tpu.pipeline_mode<synchronous>, transform_indices = @transform_3, window_bounds = array<i64: 64, 128>}, {pipeline_mode = #tpu.pipeline_mode<synchronous>, transform_indices = @transform_4, window_bounds = array<i64: 1, 128>}, {transform_indices = @transform_5, window_bounds = array<i64: 8, 128>}]} {
    %c0 = arith.constant 0 : index
    %c0_0 = arith.constant 0 : index
    %0 = vector.load %arg1[%c0, %c0_0] : memref<8x32xf32, #tpu.memory_space<vmem>>, vector<8x32xf32>
    %c0_1 = arith.constant 0 : index
    %c0_2 = arith.constant 0 : index
    %1 = vector.load %arg2[%c0_1, %c0_2] : memref<32x64xf32, #tpu.memory_space<vmem>>, vector<32x64xf32>
    %cst = arith.constant dense<0.000000e+00> : vector<8x64xf32>
    %2 = tpu.matmul %0, %1, %cst {dimension_numbers = #tpu.dot_dimension_numbers<[1], [0], [0], [1], [0, 0, 1, 1], [], []>} : vector<8x32xf32>, vector<32x64xf32>, vector<8x64xf32> -> vector<8x64xf32>
    %c0_3 = arith.constant 0 : index
    %c0_4 = arith.constant 0 : index
    %3 = vector.load %arg3[%c0_3, %c0_4] : memref<1x64xf32, #tpu.memory_space<vmem>>, vector<1x64xf32>
    %4 = vector.broadcast %3 : vector<1x64xf32> to vector<8x64xf32>
    %5 = arith.addf %2, %4 : vector<8x64xf32>
    %cst_5 = arith.constant 0.000000e+00 : f32
    %6 = vector.broadcast %cst_5 : f32 to vector<8x64xf32>
    %7 = arith.maximumf %5, %6 : vector<8x64xf32>
    %c0_6 = arith.constant 0 : index
    %c0_7 = arith.constant 0 : index
    %8 = vector.load %arg4[%c0_6, %c0_7] : memref<64x128xf32, #tpu.memory_space<vmem>>, vector<64x128xf32>
    %cst_8 = arith.constant dense<0.000000e+00> : vector<8x128xf32>
    %9 = tpu.matmul %7, %8, %cst_8 {dimension_numbers = #tpu.dot_dimension_numbers<[1], [0], [0], [1], [0, 0, 1, 1], [], []>} : vector<8x64xf32>, vector<64x128xf32>, vector<8x128xf32> -> vector<8x128xf32>
    %c0_9 = arith.constant 0 : index
    %c0_10 = arith.constant 0 : index
    %10 = vector.load %arg5[%c0_9, %c0_10] : memref<1x128xf32, #tpu.memory_space<vmem>>, vector<1x128xf32>
    %11 = vector.broadcast %10 : vector<1x128xf32> to vector<8x128xf32>
    %12 = arith.addf %9, %11 : vector<8x128xf32>
    %c0_11 = arith.constant 0 : index
    %c0_12 = arith.constant 0 : index
    %13 = vector.load %arg6[%c0_11, %c0_12] : memref<8x128xf32, #tpu.memory_space<vmem>>, vector<8x128xf32>
    tpu.vector_store %arg6[%c0_11, %c0_12], %12 {strides = array<i32>} : memref<8x128xf32, #tpu.memory_space<vmem>>, vector<8x128xf32>,
    return
  }
  func.func @transform_0(%arg0: i32) -> (i32, i32) {
    %c0_i32 = arith.constant 0 : i32
    %c0_i32_0 = arith.constant 0 : i32
    return %arg0, %c0_i32 : i32, i32
  }
  func.func @transform_1(%arg0: i32) -> (i32, i32) {
    %c0_i32 = arith.constant 0 : i32
    %c0_i32_0 = arith.constant 0 : i32
    %c0_i32_1 = arith.constant 0 : i32
    return %c0_i32, %c0_i32_0 : i32, i32
  }
  func.func @transform_2(%arg0: i32) -> (i32, i32) {
    %c0_i32 = arith.constant 0 : i32
    %c0_i32_0 = arith.constant 0 : i32
    %c0_i32_1 = arith.constant 0 : i32
    return %c0_i32, %c0_i32_0 : i32, i32
  }
  func.func @transform_3(%arg0: i32) -> (i32, i32) {
    %c0_i32 = arith.constant 0 : i32
    %c0_i32_0 = arith.constant 0 : i32
    %c0_i32_1 = arith.constant 0 : i32
    return %c0_i32, %c0_i32_0 : i32, i32
  }
  func.func @transform_4(%arg0: i32) -> (i32, i32) {
    %c0_i32 = arith.constant 0 : i32
    %c0_i32_0 = arith.constant 0 : i32
    %c0_i32_1 = arith.constant 0 : i32
    return %c0_i32, %c0_i32_0 : i32, i32
  }
  func.func @transform_5(%arg0: i32) -> (i32, i32) {
    %c0_i32 = arith.constant 0 : i32
    %c0_i32_0 = arith.constant 0 : i32
    return %arg0, %c0_i32 : i32, i32
  }
}

</mosaic_0001>

<llo_original>
// kernel: tpu_custom_call.1
$region0: #{tpu_custom_call.1}
  #allocation0 [shape = 'u32[]', space=smem, size = 0x4, offset = 0x4, fixed_abs, tag = 'smem constant byte address 0x4 - core index']
  #allocation1 [shape = 'u32[144,128]{1,0:T(1,128)}', space=vmem, size = 0x12000, scoped, tag = 'internal scratch']
  %s0 = inlined_call_operand.hbm [shape: f32[8,32], index: 0, kind: input, shape index: {}]
  %s1 = inlined_call_operand.hbm [shape: f32[32,64], index: 1, kind: input, shape index: {}]
  %s2 = inlined_call_operand.vmem [shape: f32[1,64], index: 2, kind: input, shape index: {}]
  %s3 = inlined_call_operand.hbm [shape: f32[64,128], index: 3, kind: input, shape index: {}]
  %s4 = inlined_call_operand.vmem [shape: f32[1,128], index: 4, kind: input, shape index: {}]
  %s5 = inlined_call_operand.hbm [shape: f32[8,128], index: 5, kind: output, shape index: {}]
  %s6 = sld [smem:[#allocation0]]
  $region42: #{tpu_custom_call.1} parent=0
    _
  %s8 = ssub.s32 1, %s6
  %s9 = scalar_select 0, %s8, %s6
  $region1: #{tpu_custom_call.1} parent=0
    #allocation2 [shape = 'u8[4096]{0}', space=vmem, size = 0x1000, scoped, tag = 'input window, operand 0, single buffered']
    #allocation3 [shape = 's32[1]{0}', space=sflag, size = 0x4, scoped, tag = 'scoped memory for tpu_custom_call.1']
    #allocation4 [shape = 's32[1]{0}', space=sflag, size = 0x4, scoped, tag = 'scoped memory for tpu_custom_call.1']
    #allocation5 [shape = 'u8[16384]{0}', space=vmem, size = 0x4000, scoped, tag = 'input window, operand 1, single buffered']
    #allocation6 [shape = 's32[1]{0}', space=sflag, size = 0x4, scoped, tag = 'scoped memory for tpu_custom_call.1']
    #allocation7 [shape = 'u8[32768]{0}', space=vmem, size = 0x8000, scoped, tag = 'input window, operand 3, single buffered']
    #allocation8 [shape = 'u8[4096]{0}', space=vmem, size = 0x1000, scoped, tag = 'output window, operand 0, single buffered']
    %10 = vsyncpa [#allocation3], 0
    %11 = vsyncpa [#allocation6], 0
    %12 = vsyncpa [#allocation4], 0
    // Predicated region
    $region2: #{tpu_custom_call.1} parent=1 // pred_check
      _
    $region3: #{tpu_custom_call.1} parent=1 // pred_check_branch
      %14 = sbr.rel (0) target = $region5
    $region4: #{tpu_custom_call.1} parent=1 // pred_region
      %s16 = ssub.s32 128, 128
      %17 = vsyncadd [#allocation3], %s16
      %s19 = sshll.u32 [#allocation2], 4
      %s20 = int_to_ptr.vmem [resolvable:$true] %s19
      %22 = dma.hbm_to_vmem [thread:$0]  %s0, 128, %s20, [#allocation3]
    $region5: #{tpu_custom_call.1} parent=1 // pred_fallthru
      _
    // Predicated region
    $region6: #{tpu_custom_call.1} parent=1 // pred_check
      _
    $region7: #{tpu_custom_call.1} parent=1 // pred_check_branch
      %24 = sbr.rel (0) target = $region9
    $region8: #{tpu_custom_call.1} parent=1 // pred_region
      %s26 = ssub.s32 512, 512
      %27 = vsyncadd [#allocation6], %s26
      %s28 = sshll.u32 [#allocation5], 4
      %s29 = int_to_ptr.vmem [resolvable:$true] %s28
      %34 = dma.hbm_to_vmem [thread:$0]  %s1, 512, %s29, [#allocation6], 128, 128, 8
    $region9: #{tpu_custom_call.1} parent=1 // pred_fallthru
      _
    // Predicated region
    $region10: #{tpu_custom_call.1} parent=1 // pred_check
      _
    $region11: #{tpu_custom_call.1} parent=1 // pred_check_branch
      %36 = sbr.rel (0) target = $region13
    $region12: #{tpu_custom_call.1} parent=1 // pred_region
      _
    $region13: #{tpu_custom_call.1} parent=1 // pred_fallthru
      _
    // Predicated region
    $region14: #{tpu_custom_call.1} parent=1 // pred_check
      _
    $region15: #{tpu_custom_call.1} parent=1 // pred_check_branch
      %38 = sbr.rel (0) target = $region17
    $region16: #{tpu_custom_call.1} parent=1 // pred_region
      %s40 = ssub.s32 1024, 1024
      %41 = vsyncadd [#allocation6], %s40
      %s42 = sshll.u32 [#allocation7], 4
      %s43 = int_to_ptr.vmem [resolvable:$true] %s42
      %48 = dma.hbm_to_vmem [thread:$0]  %s3, 1024, %s43, [#allocation6], 128, 128, 8
    $region17: #{tpu_custom_call.1} parent=1 // pred_fallthru
      _
    // Predicated region
    $region18: #{tpu_custom_call.1} parent=1 // pred_check
      _
    $region19: #{tpu_custom_call.1} parent=1 // pred_check_branch
      %50 = sbr.rel (0) target = $region21
    $region20: #{tpu_custom_call.1} parent=1 // pred_region
      _
    $region21: #{tpu_custom_call.1} parent=1 // pred_fallthru
      _
    // Predicated region
    $region22: #{tpu_custom_call.1} parent=1 // pred_check
      _
    $region23: #{tpu_custom_call.1} parent=1 // pred_check_branch
      %52 = sbr.rel (0) target = $region25
    $region24: #{tpu_custom_call.1} parent=1 // pred_region
      %53 = dma.done [#allocation3], 128
    $region25: #{tpu_custom_call.1} parent=1 // pred_fallthru
      _
    // Predicated region
    $region26: #{tpu_custom_call.1} parent=1 // pred_check
      _
    $region27: #{tpu_custom_call.1} parent=1 // pred_check_branch
      %55 = sbr.rel (0) target = $region29
    $region28: #{tpu_custom_call.1} parent=1 // pred_region
      %56 = dma.done [#allocation6], 512
    $region29: #{tpu_custom_call.1} parent=1 // pred_fallthru
      _
    // Predicated region
    $region30: #{tpu_custom_call.1} parent=1 // pred_check
      _
    $region31: #{tpu_custom_call.1} parent=1 // pred_check_branch
      %58 = sbr.rel (0) target = $region33
    $region32: #{tpu_custom_call.1} parent=1 // pred_region
      %59 = dma.done [#allocation6], 1024
    $region33: #{tpu_custom_call.1} parent=1 // pred_fallthru
      _
    %v60 = vld [vmem:[#allocation2] sm:$0xff]
    %v61 = vld [vmem:[#allocation5] sm:$0xff]
    %v62 = vld [vmem:[#allocation5 + $0x8] sm:$0xff]
    %v63 = vld [vmem:[#allocation5 + $0x10] sm:$0xff]
    %v64 = vld [vmem:[#allocation5 + $0x18] sm:$0xff]
    %v65 = vld [vmem:[%s2] sm:$0x1]
    %v67 = vlaneseq
    %v68 = vshrl.u32 %v67, 7
    %v69 = vsub.s32 0, %v68
    %v70 = vrot.slane %v65, %v69
    %vm72 = vcmask 261120
    %v74 = vsel %vm72, %v60, 0
    %76 = vmatprep.subr.mxu0 0.0
    %77 = vmatpush1.msra.mxu0 %v61
    %78 = vmatprep.subr.mxu0 0.0
    %79 = vmatpush1.msra.mxu0 %v62
    %80 = vmatprep.subr.mxu0 0.0
    %81 = vmatpush1.msra.mxu0 %v63
    %82 = vmatprep.subr.mxu0 0.0
    %83 = vmatpush1.msra.mxu0 %v64
    %84 = vmatprep.subr.mxu0 0.0
    %85 = vmatpush1.msra.mxu0 0.0
    %86 = vmatprep.subr.mxu0 0.0
    %87 = vmatpush1.msra.mxu0 0.0
    %88 = vmatprep.subr.mxu0 0.0
    %89 = vmatpush1.msra.mxu0 0.0
    %90 = vmatprep.subr.mxu0 0.0
    %91 = vmatpush1.msra.mxu0 0.0
    %92 = vmatprep.subr.mxu0 0.0
    %93 = vmatpush1.msra.mxu0 0.0
    %94 = vmatprep.subr.mxu0 0.0
    %95 = vmatpush1.msra.mxu0 0.0
    %96 = vmatprep.subr.mxu0 0.0
    %97 = vmatpush1.msra.mxu0 0.0
    %98 = vmatprep.subr.mxu0 0.0
    %99 = vmatpush1.msra.mxu0 0.0
    %100 = vmatprep.subr.mxu0 0.0
    %101 = vmatpush1.msra.mxu0 0.0
    %102 = vmatprep.subr.mxu0 0.0
    %103 = vmatpush1.msra.mxu0 0.0
    %104 = vmatprep.subr.mxu0 0.0
    %105 = vmatpush1.msra.mxu0 0.0
    %106 = vmatprep.subr.mxu0 0.0
    %107 = vmatpush1.msra.mxu0 0.0
    %108 = vmatprep.subr.mxu0 0.0
    %109 = vmatpush1.msra.mxu0 0.0
    %110 = vmatprep.subr.mxu0 0.0
    %111 = vmatpush1.msra.mxu0 0.0
    %112 = vmatprep.subr.mxu0 0.0
    %113 = vmatpush1.msra.mxu0 0.0
    %114 = vmatprep.subr.mxu0 0.0
    %115 = vmatpush1.msra.mxu0 0.0
    %116 = vmatprep.subr.mxu0 0.0
    %117 = vmatpush1.msra.mxu0 0.0
    %118 = vmatprep.subr.mxu0 0.0
    %119 = vmatpush1.msra.mxu0 0.0
    %120 = vmatprep.subr.mxu0 0.0
    %121 = vmatpush1.msra.mxu0 0.0
    %122 = vmatprep.subr.mxu0 0.0
    %123 = vmatpush1.msra.mxu0 0.0
    %124 = vmatprep.subr.mxu0 0.0
    %125 = vmatpush1.msra.mxu0 0.0
    %126 = vmatprep.subr.mxu0 0.0
    %127 = vmatpush1.msra.mxu0 0.0
    %128 = vmatprep.subr.mxu0 0.0
    %129 = vmatpush1.msra.mxu0 0.0
    %130 = vmatprep.subr.mxu0 0.0
    %131 = vmatpush1.msra.mxu0 0.0
    %132 = vmatprep.subr.mxu0 0.0
    %133 = vmatpush1.msra.mxu0 0.0
    %134 = vmatprep.subr.mxu0 0.0
    %135 = vmatpush1.msra.mxu0 0.0
    %136 = vmatprep.subr.mxu0 0.0
    %137 = vmatpush1.msra.mxu0 0.0
    %138 = vmatprep.subr.mxu0 0.0
    %139 = vmatpush1.msra.mxu0 0.0
    %140 = vmatprep.mubr.f32.mxu0 0.0
    %141 = vmatmul.mubr.f32.gmra.mrb[0].mxu0 %v74
    %v142 = vpop.f32.mrb[0].mxu0
    %v143 = vadd.f32 %v70, %v142
    %v144 = vpop.f32.mrb[0].mxu0
    %145 = vdwg.mxu0
    %v146 = vmax.f32 %v143, 0.0
    %v147 = vld [vmem:[#allocation7] sm:$0xff]
    %v148 = vld [vmem:[#allocation7 + $0x8] sm:$0xff]
    %v149 = vld [vmem:[#allocation7 + $0x10] sm:$0xff]
    %v150 = vld [vmem:[#allocation7 + $0x18] sm:$0xff]
    %v151 = vld [vmem:[#allocation7 + $0x20] sm:$0xff]
    %v152 = vld [vmem:[#allocation7 + $0x28] sm:$0xff]
    %v153 = vld [vmem:[#allocation7 + $0x30] sm:$0xff]
    %v154 = vld [vmem:[#allocation7 + $0x38] sm:$0xff]
    %v155 = vld [vmem:[%s4] sm:$0x1]
    %v157 = vlaneseq
    %v158 = vshrl.u32 %v157, 7
    %v159 = vsub.s32 0, %v158
    %v160 = vrot.slane %v155, %v159
    %vm162 = vcmask 523264
    %v164 = vsel %vm162, %v146, 0
    %166 = vmatprep.subr.mxu0 0.0
    %167 = vmatpush1.msra.mxu0 %v147
    %168 = vmatprep.subr.mxu0 0.0
    %169 = vmatpush1.msra.mxu0 %v148
    %170 = vmatprep.subr.mxu0 0.0
    %171 = vmatpush1.msra.mxu0 %v149
    %172 = vmatprep.subr.mxu0 0.0
    %173 = vmatpush1.msra.mxu0 %v150
    %174 = vmatprep.subr.mxu0 0.0
    %175 = vmatpush1.msra.mxu0 %v151
    %176 = vmatprep.subr.mxu0 0.0
    %177 = vmatpush1.msra.mxu0 %v152
    %178 = vmatprep.subr.mxu0 0.0
    %179 = vmatpush1.msra.mxu0 %v153
    %180 = vmatprep.subr.mxu0 0.0
    %181 = vmatpush1.msra.mxu0 %v154
    %182 = vmatprep.subr.mxu0 0.0
    %183 = vmatpush1.msra.mxu0 0.0
    %184 = vmatprep.subr.mxu0 0.0
    %185 = vmatpush1.msra.mxu0 0.0
    %186 = vmatprep.subr.mxu0 0.0
    %187 = vmatpush1.msra.mxu0 0.0
    %188 = vmatprep.subr.mxu0 0.0
    %189 = vmatpush1.msra.mxu0 0.0
    %190 = vmatprep.subr.mxu0 0.0
    %191 = vmatpush1.msra.mxu0 0.0
    %192 = vmatprep.subr.mxu0 0.0
    %193 = vmatpush1.msra.mxu0 0.0
    %194 = vmatprep.subr.mxu0 0.0
    %195 = vmatpush1.msra.mxu0 0.0
    %196 = vmatprep.subr.mxu0 0.0
    %197 = vmatpush1.msra.mxu0 0.0
    %198 = vmatprep.subr.mxu0 0.0
    %199 = vmatpush1.msra.mxu0 0.0
    %200 = vmatprep.subr.mxu0 0.0
    %201 = vmatpush1.msra.mxu0 0.0
    %202 = vmatprep.subr.mxu0 0.0
    %203 = vmatpush1.msra.mxu0 0.0
    %204 = vmatprep.subr.mxu0 0.0
    %205 = vmatpush1.msra.mxu0 0.0
    %206 = vmatprep.subr.mxu0 0.0
    %207 = vmatpush1.msra.mxu0 0.0
    %208 = vmatprep.subr.mxu0 0.0
    %209 = vmatpush1.msra.mxu0 0.0
    %210 = vmatprep.subr.mxu0 0.0
    %211 = vmatpush1.msra.mxu0 0.0
    %212 = vmatprep.subr.mxu0 0.0
    %213 = vmatpush1.msra.mxu0 0.0
    %214 = vmatprep.subr.mxu0 0.0
    %215 = vmatpush1.msra.mxu0 0.0
    %216 = vmatprep.subr.mxu0 0.0
    %217 = vmatpush1.msra.mxu0 0.0
    %218 = vmatprep.subr.mxu0 0.0
    %219 = vmatpush1.msra.mxu0 0.0
    %220 = vmatprep.subr.mxu0 0.0
    %221 = vmatpush1.msra.mxu0 0.0
    %222 = vmatprep.subr.mxu0 0.0
    %223 = vmatpush1.msra.mxu0 0.0
    %224 = vmatprep.subr.mxu0 0.0
    %225 = vmatpush1.msra.mxu0 0.0
    %226 = vmatprep.subr.mxu0 0.0
    %227 = vmatpush1.msra.mxu0 0.0
    %228 = vmatprep.subr.mxu0 0.0
    %229 = vmatpush1.msra.mxu0 0.0
    %230 = vmatprep.mubr.f32.mxu0 0.0
    %231 = vmatmul.mubr.f32.gmra.mrb[0].mxu0 %v164
    %v232 = vpop.f32.mrb[0].mxu0
    %v233 = vadd.f32 %v160, %v232
    %v234 = vpop.f32.mrb[0].mxu0
    %235 = vdwg.mxu0
    %236 = vst [vmem:[#allocation8] sm:$0xff] %v233
    // Predicated region
    $region34: #{tpu_custom_call.1} parent=1 // pred_check
      _
    $region35: #{tpu_custom_call.1} parent=1 // pred_check_branch
      %238 = sbr.rel (0) target = $region37
    $region36: #{tpu_custom_call.1} parent=1 // pred_region
      %s240 = ssub.s32 128, 128
      %241 = vsyncadd [#allocation4], %s240
      %s243 = sshll.u32 [#allocation8], 4
      %s244 = int_to_ptr.vmem [resolvable:$true] %s243
      %246 = dma.vmem_to_hbm [thread:$0]  %s244, 128, %s5, [#allocation4]
    $region37: #{tpu_custom_call.1} parent=1 // pred_fallthru
      _
    // Predicated region
    $region38: #{tpu_custom_call.1} parent=1 // pred_check
      _
    $region39: #{tpu_custom_call.1} parent=1 // pred_check_branch
      %248 = sbr.rel (0) target = $region41
    $region40: #{tpu_custom_call.1} parent=1 // pred_region
      %249 = dma.done [#allocation4], 128
    $region41: #{tpu_custom_call.1} parent=1 // pred_fallthru
      _
    %250 = vsyncpa [#allocation3], 1
    %251 = vsyncpa [#allocation6], 1
    %252 = vsyncpa [#allocation4], 1

</llo_original>
